<compile_context>
chip_gen: v6e
topology: v6e:2x2x1
jax: 0.10.0
libtpu: 0.0.40
codegen_flags: <defaults>
</compile_context>

<pallas_src>
import jax
import jax.numpy as jnp
from jax.experimental import pallas as pl
from jax.experimental.pallas import tpu as pltpu


def _mlp_kernel(x_ref, w1_ref, b1_ref, w2_ref, b2_ref, o_ref):
    # x_ref: (TILE_B, L) native dtype; w1: (L, 128) bf16; w2: (128, 128) bf16;
    # b1/b2: (1, 128) f32; o_ref: (TILE_B, 128) out_dtype.
    # In-kernel cast of the MXU operand (avoids an extra wrapper HBM pass).
    x = x_ref[...].astype(jnp.bfloat16)

    # fc1 + ReLU: bf16 MXU operands, f32 accumulation; bias/ReLU in f32.
    h = jnp.dot(x, w1_ref[...], preferred_element_type=jnp.float32) + b1_ref[...]
    h = jnp.maximum(h, 0.0)

    # fc2 + ReLU: cast activation to bf16 only for the MXU operand.
    y = (
        jnp.dot(h.astype(jnp.bfloat16), w2_ref[...],
                preferred_element_type=jnp.float32)
        + b2_ref[...]
    )
    o_ref[...] = jnp.maximum(y, 0.0).astype(o_ref.dtype)


def single_label_encoder(x, w1, b1, w2, b2, *, tile_b=1024,
                         out_dtype=jnp.bfloat16):
    """x: [B, number_labels] (any float dtype); w1: [number_labels, 128];
    w2: [128, 128]; b1, b2: [1, 128] or [128].
    Returns [B, 128] in out_dtype (bf16 by default; pass jnp.float32 for the
    PyTorch-matching width)."""
    B, L = x.shape
    H = w1.shape[1]

    # Small, one-time weight casts (resident operands).
    w1_bf = w1.astype(jnp.bfloat16)
    w2_bf = w2.astype(jnp.bfloat16)
    b1_f = jnp.asarray(b1, jnp.float32).reshape(1, H)
    b2_f = jnp.asarray(b2, jnp.float32).reshape(1, H)

    # Batch tile: multiple of 16 (bf16 sublane packing), capped so the grid has
    # at least 2 steps whenever B allows it (v7x megacore sharding), and never
    # bigger than needed. Double-buffered live set stays a few MiB.
    cap = ((int(tile_b) + 15) // 16) * 16
    cap = min(max(16, cap), 8192)
    half_up = ((-(-B // 2) + 15) // 16) * 16       # round_up(cdiv(B, 2), 16)
    tb = min(cap, max(16, half_up))

    grid = (pl.cdiv(B, tb),)                        # ragged last block is fine:
    # rows are independent, Pallas clips the out-of-bounds writes of the tail.
    out = pl.pallas_call(
        _mlp_kernel,
        out_shape=jax.ShapeDtypeStruct((B, H), out_dtype),
        grid=grid,
        in_specs=[
            pl.BlockSpec((tb, L), lambda i: (i, 0)),   # x: tiled over batch
            pl.BlockSpec((L, H), lambda i: (0, 0)),    # w1: resident
            pl.BlockSpec((1, H), lambda i: (0, 0)),    # b1: resident
            pl.BlockSpec((H, H), lambda i: (0, 0)),    # w2: resident
            pl.BlockSpec((1, H), lambda i: (0, 0)),    # b2: resident
        ],
        out_specs=pl.BlockSpec((tb, H), lambda i: (i, 0)),
        compiler_params=pltpu.CompilerParams(
            dimension_semantics=("parallel",),   # megacore sharding on v7x
        ),
    )(x, w1_bf, b1_f, w2_bf, b2_f)
    return out


def init_params(key, number_labels, hidden=128):
    """Deterministic synthetic init (PyTorch-Linear-like uniform fan-in scaling).
    Weights returned as [in, out] (pre-transposed for the kernel)."""
    k1, k2, k3, k4 = jax.random.split(key, 4)
    lim1 = 1.0 / jnp.sqrt(number_labels)
    lim2 = 1.0 / jnp.sqrt(hidden)
    w1 = jax.random.uniform(k1, (number_labels, hidden), jnp.float32, -lim1, lim1)
    b1 = jax.random.uniform(k2, (1, hidden), jnp.float32, -lim1, lim1)
    w2 = jax.random.uniform(k3, (hidden, hidden), jnp.float32, -lim2, lim2)
    b2 = jax.random.uniform(k4, (1, hidden), jnp.float32, -lim2, lim2)
    return w1, b1, w2, b2


if __name__ == "__main__":
    number_labels = 16   # e.g. number of layout categories
    batch = 50           # non-multiple of the tile -> exercises ragged last block
    hidden = 128

    key = jax.random.PRNGKey(0)
    kx, kp = jax.random.split(key)

    x = jax.random.normal(kx, (batch, number_labels), jnp.float32)
    w1, b1, w2, b2 = init_params(kp, number_labels, hidden)

    # Default path: bf16 output, tb auto-clamped to 32 -> grid of 2 steps with a
    # ragged second block (50 = 32 + 18).
    out = single_label_encoder(x, w1, b1, w2, b2)
    out = jax.block_until_ready(out)
    assert out.shape == (batch, hidden)
    assert out.dtype == jnp.bfloat16

    out_f32 = out.astype(jnp.float32)

    # Reference with the SAME math as the kernel (bf16 MXU operands, f32 acc,
    # f32 bias/ReLU, bf16 output cast).
    xb = x.astype(jnp.bfloat16)
    w1b = w1.astype(jnp.bfloat16)
    w2b = w2.astype(jnp.bfloat16)
    h = jnp.maximum(
        jnp.dot(xb, w1b, preferred_element_type=jnp.float32) + b1, 0.0)
    ref_bf = jnp.maximum(
        jnp.dot(h.astype(jnp.bfloat16), w2b,
                preferred_element_type=jnp.float32) + b2, 0.0)
    ref_bf = ref_bf.astype(jnp.bfloat16).astype(jnp.float32)
    assert jnp.allclose(out_f32, ref_bf, atol=1e-2, rtol=1e-2), \
        "mismatch vs bf16 reference"

    # Loose check against the full-f32 PyTorch-equivalent reference
    # (bf16 operand/output rounding bounds the error).
    ref_f32 = jnp.maximum(jnp.maximum(x @ w1 + b1, 0.0) @ w2 + b2, 0.0)
    max_err = jnp.max(jnp.abs(out_f32 - ref_f32))
    scale = jnp.maximum(jnp.max(jnp.abs(ref_f32)), 1.0)
    assert max_err / scale < 3e-2, f"too far from f32 reference: {max_err}"

    # Also exercise the f32-output path (PyTorch-width semantics) once.
    out32 = single_label_encoder(x, w1, b1, w2, b2, out_dtype=jnp.float32)
    out32 = jax.block_until_ready(out32)
    assert out32.shape == (batch, hidden) and out32.dtype == jnp.float32

    print("KERNEL_OK")
</pallas_src>

<mosaic_0001>
module attributes {stable_mosaic.version = 11 : i64} {
  func.func @_mlp_kernel(%arg0: i32, %arg1: memref<32x16xf32, #tpu.memory_space<vmem>>, %arg2: memref<16x128xbf16, #tpu.memory_space<vmem>>, %arg3: memref<1x128xf32, #tpu.memory_space<vmem>>, %arg4: memref<128x128xbf16, #tpu.memory_space<vmem>>, %arg5: memref<1x128xf32, #tpu.memory_space<vmem>>, %arg6: memref<32x128xbf16, #tpu.memory_space<vmem>>) attributes {dimension_semantics = [#tpu.dimension_semantics<parallel>], iteration_bounds = array<i64: 2>, scalar_prefetch = 0 : i64, scratch_operands = 0 : i64, tpu.core_type = #tpu.core_type<tc>, window_params = [{transform_indices = @transform_0, window_bounds = array<i64: 32, 16>}, {pipeline_mode = #tpu.pipeline_mode<synchronous>, transform_indices = @transform_1, window_bounds = array<i64: 16, 128>}, {pipeline_mode = #tpu.pipeline_mode<synchronous>, transform_indices = @transform_2, window_bounds = array<i64: 1, 128>}, {pipeline_mode = #tpu.pipeline_mode<synchronous>, transform_indices = @transform_3, window_bounds = array<i64: 128, 128>}, {pipeline_mode = #tpu.pipeline_mode<synchronous>, transform_indices = @transform_4, window_bounds = array<i64: 1, 128>}, {transform_indices = @transform_5, window_bounds = array<i64: 32, 128>}]} {
    %c0 = arith.constant 0 : index
    %c0_0 = arith.constant 0 : index
    %0 = vector.load %arg1[%c0, %c0_0] : memref<32x16xf32, #tpu.memory_space<vmem>>, vector<32x16xf32>
    %1 = arith.truncf %0 : vector<32x16xf32> to vector<32x16xbf16>
    %c0_1 = arith.constant 0 : index
    %c0_2 = arith.constant 0 : index
    %2 = vector.load %arg2[%c0_1, %c0_2] : memref<16x128xbf16, #tpu.memory_space<vmem>>, vector<16x128xbf16>
    %cst = arith.constant dense<0.000000e+00> : vector<32x128xf32>
    %3 = tpu.matmul %1, %2, %cst {dimension_numbers = #tpu.dot_dimension_numbers<[1], [0], [0], [1], [0, 0, 1, 1], [], []>} : vector<32x16xbf16>, vector<16x128xbf16>, vector<32x128xf32> -> vector<32x128xf32>
    %c0_3 = arith.constant 0 : index
    %c0_4 = arith.constant 0 : index
    %4 = vector.load %arg3[%c0_3, %c0_4] : memref<1x128xf32, #tpu.memory_space<vmem>>, vector<1x128xf32>
    %5 = vector.broadcast %4 : vector<1x128xf32> to vector<32x128xf32>
    %6 = arith.addf %3, %5 : vector<32x128xf32>
    %cst_5 = arith.constant 0.000000e+00 : f32
    %7 = vector.broadcast %cst_5 : f32 to vector<32x128xf32>
    %8 = arith.maximumf %6, %7 : vector<32x128xf32>
    %9 = arith.truncf %8 : vector<32x128xf32> to vector<32x128xbf16>
    %c0_6 = arith.constant 0 : index
    %c0_7 = arith.constant 0 : index
    %10 = vector.load %arg4[%c0_6, %c0_7] : memref<128x128xbf16, #tpu.memory_space<vmem>>, vector<128x128xbf16>
    %cst_8 = arith.constant dense<0.000000e+00> : vector<32x128xf32>
    %11 = tpu.matmul %9, %10, %cst_8 {dimension_numbers = #tpu.dot_dimension_numbers<[1], [0], [0], [1], [0, 0, 1, 1], [], []>} : vector<32x128xbf16>, vector<128x128xbf16>, vector<32x128xf32> -> vector<32x128xf32>
    %c0_9 = arith.constant 0 : index
    %c0_10 = arith.constant 0 : index
    %12 = vector.load %arg5[%c0_9, %c0_10] : memref<1x128xf32, #tpu.memory_space<vmem>>, vector<1x128xf32>
    %13 = vector.broadcast %12 : vector<1x128xf32> to vector<32x128xf32>
    %14 = arith.addf %11, %13 : vector<32x128xf32>
    %cst_11 = arith.constant 0.000000e+00 : f32
    %15 = vector.broadcast %cst_11 : f32 to vector<32x128xf32>
    %16 = arith.maximumf %14, %15 : vector<32x128xf32>
    %17 = arith.truncf %16 : vector<32x128xf32> to vector<32x128xbf16>
    %c0_12 = arith.constant 0 : index
    %c0_13 = arith.constant 0 : index
    %18 = vector.load %arg6[%c0_12, %c0_13] : memref<32x128xbf16, #tpu.memory_space<vmem>>, vector<32x128xbf16>
    tpu.vector_store %arg6[%c0_12, %c0_13], %17 {strides = array<i32>} : memref<32x128xbf16, #tpu.memory_space<vmem>>, vector<32x128xbf16>,
    return
  }
  func.func @transform_0(%arg0: i32) -> (i32, i32) {
    %c0_i32 = arith.constant 0 : i32
    %c0_i32_0 = arith.constant 0 : i32
    return %arg0, %c0_i32 : i32, i32
  }
  func.func @transform_1(%arg0: i32) -> (i32, i32) {
    %c0_i32 = arith.constant 0 : i32
    %c0_i32_0 = arith.constant 0 : i32
    %c0_i32_1 = arith.constant 0 : i32
    return %c0_i32, %c0_i32_0 : i32, i32
  }
  func.func @transform_2(%arg0: i32) -> (i32, i32) {
    %c0_i32 = arith.constant 0 : i32
    %c0_i32_0 = arith.constant 0 : i32
    %c0_i32_1 = arith.constant 0 : i32
    return %c0_i32, %c0_i32_0 : i32, i32
  }
  func.func @transform_3(%arg0: i32) -> (i32, i32) {
    %c0_i32 = arith.constant 0 : i32
    %c0_i32_0 = arith.constant 0 : i32
    %c0_i32_1 = arith.constant 0 : i32
    return %c0_i32, %c0_i32_0 : i32, i32
  }
  func.func @transform_4(%arg0: i32) -> (i32, i32) {
    %c0_i32 = arith.constant 0 : i32
    %c0_i32_0 = arith.constant 0 : i32
    %c0_i32_1 = arith.constant 0 : i32
    return %c0_i32, %c0_i32_0 : i32, i32
  }
  func.func @transform_5(%arg0: i32) -> (i32, i32) {
    %c0_i32 = arith.constant 0 : i32
    %c0_i32_0 = arith.constant 0 : i32
    return %arg0, %c0_i32 : i32, i32
  }
}

</mosaic_0001>

<llo_original>
// kernel: tpu_custom_call.1
$region0: #{tpu_custom_call.1}
  #allocation0 [shape = 'u32[]', space=smem, size = 0x4, offset = 0x4, fixed_abs, tag = 'smem constant byte address 0x4 - core index']
  #allocation1 [shape = 'u32[144,128]{1,0:T(1,128)}', space=vmem, size = 0x12000, scoped, tag = 'internal scratch']
  %s0 = inlined_call_operand.vmem [shape: f32[50,16], index: 0, kind: input, shape index: {}]
  %s1 = inlined_call_operand.vmem [shape: bf16[16,128], index: 1, kind: input, shape index: {}]
  %s2 = inlined_call_operand.vmem [shape: f32[1,128], index: 2, kind: input, shape index: {}]
  %s3 = inlined_call_operand.vmem [shape: bf16[128,128], index: 3, kind: input, shape index: {}]
  %s4 = inlined_call_operand.vmem [shape: f32[1,128], index: 4, kind: input, shape index: {}]
  %s5 = inlined_call_operand.hbm [shape: bf16[50,128], index: 5, kind: output, shape index: {}]
  %s6 = sld [smem:[#allocation0]]
  $region53: #{tpu_custom_call.1} parent=0
    _
  %s8 = ssub.s32 1, %s6
  %s9 = scalar_select 0, %s8, %s6
  $region1: #{tpu_custom_call.1} parent=0
    #allocation2 [shape = 'u8[16384]{0}', space=vmem, size = 0x4000, scoped, tag = 'output window, operand 0']
    #allocation3 [shape = 's32[2]{0}', space=sflag, size = 0x8, scoped, tag = 'scoped memory for tpu_custom_call.1']
    %10 = vsyncpa [#allocation3], 0
    %s11 = scalar_lea.sflag [#allocation3], 1
    %12 = vsyncpa %s11, 0
    loop: start=0, step=1, limit=4
    $region2: #{tpu_custom_call.1} parent=1 // loop_pre_header
      _
    $region3: #{tpu_custom_call.1} parent=1 // loop_header
      %s14 = sphi 0, %s18
      %p15 = scmp.ge.s32.totalorder %s14, 4
      %s24 = sphi 0, %s26
      %s27 = sphi 0, %s24
      %s28 = sphi 0, %s27
      %s44 = sphi 0, %s28
      %s48 = sphi 0, %s48
      %s50 = sphi 0, %s48
      %s51 = sphi 0, %s50
      %s65 = sphi 0, %s51
      %s69 = sphi 0, %s69
      %s71 = sphi 0, %s69
      %s72 = sphi 0, %s71
      %s86 = sphi 0, %s72
      %s90 = sphi 0, %s90
      %s92 = sphi 0, %s90
      %s93 = sphi 0, %s92
      %s107 = sphi 0, %s93
      %s111 = sphi 0, %s111
      %s113 = sphi 0, %s111
      %s114 = sphi 0, %s113
      %s128 = sphi 0, %s114
      %s134 = sphi 0, %s136
      %s137 = sphi 0, %s134
      %s138 = sphi 0, %s137
      %s154 = sphi 0, %s138
    $region4: #{tpu_custom_call.1} parent=1 // loop_header_branch
      %17 = sbr.rel (%p15) target = $region8
    $region5: #{tpu_custom_call.1} parent=1 // loop_body
      %s19 = ssub.s32 %s14, 1
      %s20 = ssub.s32 %s14, 2
      %s21 = sadd.s32 %s14, 1
      %s22 = ssub.s32 %s14, %s21
      %p23 = scmp.eq.s32.totalorder %s22, 0
      %s25 = sadd.s32 %s24, 1
      %s26 = scalar_select %p23, %s24, %s25
      %p29 = pneg %p23
      %p30 = scmp.eq.s32.totalorder %s14, 1
      %p31 = por %p29, %p30
      %p32 = scmp.ne.s32.totalorder %s24, %s27
      %p33 = scmp.eq.s32.totalorder %s14, 0
      %p34 = por %p32, %p33
      %p35 = scmp.ne.s32.totalorder %s24, %s27
      %p36 = scmp.eq.s32.totalorder %s19, 1
      %p37 = por %p35, %p36
      %p38 = scmp.ne.s32.totalorder %s27, %s28
      %p39 = scmp.eq.s32.totalorder %s19, 0
      %p40 = por %p38, %p39
      %p41 = scmp.ne.s32.totalorder %s27, %s28
      %p42 = scmp.eq.s32.totalorder %s20, 1
      %p43 = por %p41, %p42
      %p45 = scmp.ne.s32.totalorder %s28, %s44
      %p46 = scmp.eq.s32.totalorder %s20, 0
      %p47 = por %p45, %p46
      %s49 = sadd.s32 %s48, 1
      %p52 = scmp.eq.s32.totalorder %s14, 1
      %p53 = scmp.ne.s32.totalorder %s48, %s50
      %p54 = scmp.eq.s32.totalorder %s14, 0
      %p55 = por %p53, %p54
      %p56 = scmp.ne.s32.totalorder %s48, %s50
      %p57 = scmp.eq.s32.totalorder %s19, 1
      %p58 = por %p56, %p57
      %p59 = scmp.ne.s32.totalorder %s50, %s51
      %p60 = scmp.eq.s32.totalorder %s19, 0
      %p61 = por %p59, %p60
      %p62 = scmp.ne.s32.totalorder %s50, %s51
      %p63 = scmp.eq.s32.totalorder %s20, 1
      %p64 = por %p62, %p63
      %p66 = scmp.ne.s32.totalorder %s51, %s65
      %p67 = scmp.eq.s32.totalorder %s20, 0
      %p68 = por %p66, %p67
      %s70 = sadd.s32 %s69, 1
      %p73 = scmp.eq.s32.totalorder %s14, 1
      %p74 = scmp.ne.s32.totalorder %s69, %s71
      %p75 = scmp.eq.s32.totalorder %s14, 0
      %p76 = por %p74, %p75
      %p77 = scmp.ne.s32.totalorder %s69, %s71
      %p78 = scmp.eq.s32.totalorder %s19, 1
      %p79 = por %p77, %p78
      %p80 = scmp.ne.s32.totalorder %s71, %s72
      %p81 = scmp.eq.s32.totalorder %s19, 0
      %p82 = por %p80, %p81
      %p83 = scmp.ne.s32.totalorder %s71, %s72
      %p84 = scmp.eq.s32.totalorder %s20, 1
      %p85 = por %p83, %p84
      %p87 = scmp.ne.s32.totalorder %s72, %s86
      %p88 = scmp.eq.s32.totalorder %s20, 0
      %p89 = por %p87, %p88
      %s91 = sadd.s32 %s90, 1
      %p94 = scmp.eq.s32.totalorder %s14, 1
      %p95 = scmp.ne.s32.totalorder %s90, %s92
      %p96 = scmp.eq.s32.totalorder %s14, 0
      %p97 = por %p95, %p96
      %p98 = scmp.ne.s32.totalorder %s90, %s92
      %p99 = scmp.eq.s32.totalorder %s19, 1
      %p100 = por %p98, %p99
      %p101 = scmp.ne.s32.totalorder %s92, %s93
      %p102 = scmp.eq.s32.totalorder %s19, 0
      %p103 = por %p101, %p102
      %p104 = scmp.ne.s32.totalorder %s92, %s93
      %p105 = scmp.eq.s32.totalorder %s20, 1
      %p106 = por %p104, %p105
      %p108 = scmp.ne.s32.totalorder %s93, %s107
      %p109 = scmp.eq.s32.totalorder %s20, 0
      %p110 = por %p108, %p109
      %s112 = sadd.s32 %s111, 1
      %p115 = scmp.eq.s32.totalorder %s14, 1
      %p116 = scmp.ne.s32.totalorder %s111, %s113
      %p117 = scmp.eq.s32.totalorder %s14, 0
      %p118 = por %p116, %p117
      %p119 = scmp.ne.s32.totalorder %s111, %s113
      %p120 = scmp.eq.s32.totalorder %s19, 1
      %p121 = por %p119, %p120
      %p122 = scmp.ne.s32.totalorder %s113, %s114
      %p123 = scmp.eq.s32.totalorder %s19, 0
      %p124 = por %p122, %p123
      %p125 = scmp.ne.s32.totalorder %s113, %s114
      %p126 = scmp.eq.s32.totalorder %s20, 1
      %p127 = por %p125, %p126
      %p129 = scmp.ne.s32.totalorder %s114, %s128
      %p130 = scmp.eq.s32.totalorder %s20, 0
      %p131 = por %p129, %p130
      %s132 = ssub.s32 %s14, %s21
      %p133 = scmp.eq.s32.totalorder %s132, 0
      %s135 = sadd.s32 %s134, 1
      %s136 = scalar_select %p133, %s134, %s135
      %p139 = pneg %p133
      %p140 = scmp.eq.s32.totalorder %s14, 1
      %p141 = por %p139, %p140
      %p142 = scmp.ne.s32.totalorder %s134, %s137
      %p143 = scmp.eq.s32.totalorder %s14, 0
      %p144 = por %p142, %p143
      %p145 = scmp.ne.s32.totalorder %s134, %s137
      %p146 = scmp.eq.s32.totalorder %s19, 1
      %p147 = por %p145, %p146
      %p148 = scmp.ne.s32.totalorder %s137, %s138
      %p149 = scmp.eq.s32.totalorder %s19, 0
      %p150 = por %p148, %p149
      %p151 = scmp.ne.s32.totalorder %s137, %s138
      %p152 = scmp.eq.s32.totalorder %s20, 1
      %p153 = por %p151, %p152
      %p155 = scmp.ne.s32.totalorder %s138, %s154
      %p156 = scmp.eq.s32.totalorder %s20, 0
      %p157 = por %p155, %p156
      %p158 = scmp.le.s32.totalorder 1, %s14
      %p159 = scmp.lt.s32.totalorder %s14, 3
      %p160 = pnand %p158, %p159
      %p161 = pneg %p160
      // Predicated region
      $region9: #{tpu_custom_call.1} parent=5 // pred_check
        _
      $region10: #{tpu_custom_call.1} parent=5 // pred_check_branch
        %163 = sbr.rel (%p160) target = $region12
      $region11: #{tpu_custom_call.1} parent=5 // pred_region
        %s164 = ssub.s32 %s14, 1
        // Predicated region
        $region13: #{tpu_custom_call.1} parent=11 // pred_check
          %p165 = pneg %p61
        $region14: #{tpu_custom_call.1} parent=11 // pred_check_branch
          %167 = sbr.rel (%p165) target = $region16
        $region15: #{tpu_custom_call.1} parent=11 // pred_region
          _
        $region16: #{tpu_custom_call.1} parent=11 // pred_fallthru
          _
        // Predicated region
        $region17: #{tpu_custom_call.1} parent=11 // pred_check
          %p168 = pneg %p82
        $region18: #{tpu_custom_call.1} parent=11 // pred_check_branch
          %170 = sbr.rel (%p168) target = $region20
        $region19: #{tpu_custom_call.1} parent=11 // pred_region
          _
        $region20: #{tpu_custom_call.1} parent=11 // pred_fallthru
          _
        // Predicated region
        $region21: #{tpu_custom_call.1} parent=11 // pred_check
          %p171 = pneg %p103
        $region22: #{tpu_custom_call.1} parent=11 // pred_check_branch
          %173 = sbr.rel (%p171) target = $region24
        $region23: #{tpu_custom_call.1} parent=11 // pred_region
          _
        $region24: #{tpu_custom_call.1} parent=11 // pred_fallthru
          _
        // Predicated region
        $region25: #{tpu_custom_call.1} parent=11 // pred_check
          %p174 = pneg %p124
        $region26: #{tpu_custom_call.1} parent=11 // pred_check_branch
          %176 = sbr.rel (%p174) target = $region28
        $region27: #{tpu_custom_call.1} parent=11 // pred_region
          _
        $region28: #{tpu_custom_call.1} parent=11 // pred_fallthru
          _
      $region12: #{tpu_custom_call.1} parent=5 // pred_fallthru
        _
      %p177 = scmp.lt.s32.totalorder %s14, 2
      // Predicated region
      $region29: #{tpu_custom_call.1} parent=5 // pred_check
        %p178 = pneg %p177
      $region30: #{tpu_custom_call.1} parent=5 // pred_check_branch
        %180 = sbr.rel (%p178) target = $region32
      $region31: #{tpu_custom_call.1} parent=5 // pred_region
        // Predicated region
        $region33: #{tpu_custom_call.1} parent=31 // pred_check
          %p181 = pneg %p34
        $region34: #{tpu_custom_call.1} parent=31 // pred_check_branch
          %183 = sbr.rel (%p181) target = $region36
        $region35: #{tpu_custom_call.1} parent=31 // pred_region
          %s184 = smul.u32 4, %s14
          %s185 = ssub.s32 7, %s184
          %p186 = scmp.lt.s32.totalorder %s185, 4
          %s187 = scalar_select %p186, %s185, 4
          %s188 = smul.u32 128, %s187
          %p189 = scmp.lt.s32.totalorder %s184, 6
          %s190 = scalar_select %p189, %s184, 6
          %s191 = smul.addr %s190, 8
          %s192 = scalar_lea.vmem %s0, %s191
          %s193 = smul.u32 4, %s14
          %s194 = ssub.s32 7, %s193
          %p195 = scmp.lt.s32.totalorder %s194, 4
          %s196 = scalar_select %p195, %s194, 4
          %s197 = smul.u32 128, %s196
        $region36: #{tpu_custom_call.1} parent=31 // pred_fallthru
          _
      $region32: #{tpu_custom_call.1} parent=5 // pred_fallthru
        _
      %p198 = scmp.le.s32.totalorder 1, %s14
      %p199 = scmp.lt.s32.totalorder %s14, 3
      %p200 = pnand %p198, %p199
      %p201 = pneg %p200
      // Predicated region
      $region37: #{tpu_custom_call.1} parent=5 // pred_check
        _
      $region38: #{tpu_custom_call.1} parent=5 // pred_check_branch
        %203 = sbr.rel (%p200) target = $region40
      $region39: #{tpu_custom_call.1} parent=5 // pred_region
        %s204 = ssub.s32 %s14, 1
        %s205 = smul.u32 4, %s19
        %s206 = ssub.s32 7, %s205
        %p207 = scmp.lt.s32.totalorder %s206, 4
        %s208 = scalar_select %p207, %s206, 4
        %s209 = smul.u32 128, %s208
        %p210 = scmp.lt.s32.totalorder %s205, 6
        %s211 = scalar_select %p210, %s205, 6
        %s212 = smul.addr %s211, 8
        %s213 = scalar_lea.vmem %s0, %s212
        %p214 = pneg %p40
        %p215 = pneg %p37
        %p216 = pneg %p61
        %p217 = pneg %p58
        %p218 = pneg %p82
        %p219 = pneg %p79
        %p220 = pneg %p103
        %p221 = pneg %p100
        %p222 = pneg %p124
        %p223 = pneg %p121
        %p224 = pneg %p150
        %p225 = pneg %p147
        %s226 = sand.u32 %s137, 1
        %s227 = scalar_lea.sflag [#allocation3], %s226
        %s228 = sand.u32 %s137, 1
        %s229 = smul.addr %s228, 16
        %s230 = scalar_lea.vmem [#allocation2], %s229
        %s231 = smul.u32 4, %s19
        %s232 = ssub.s32 7, %s231
        %p233 = scmp.lt.s32.totalorder %s232, 4
        %s234 = scalar_select %p233, %s232, 4
        %s235 = smul.u32 128, %s234
        %p236 = scmp.lt.s32.totalorder %s231, 6
        %s237 = scalar_select %p236, %s231, 6
        %s238 = smul.addr %s237, 8
        %s239 = scalar_lea.vmem %s0, %s238
        %s240 = smul.u32 4, %s19
        %s241 = ssub.s32 7, %s240
        %p242 = scmp.lt.s32.totalorder %s241, 4
        %s243 = scalar_select %p242, %s241, 4
        %s244 = smul.u32 128, %s243
        %s245 = smul.u32 4, %s19
        %s246 = ssub.s32 7, %s245
        %p247 = scmp.lt.s32.totalorder %s246, 4
        %s248 = scalar_select %p247, %s246, 4
        %s249 = smul.u32 64, %s248
        %v251 = vld [vmem:[%s239] sm:$0xff]
        %v252 = vld [vmem:[%s239 + $0x8] sm:$0xff]
        %v253 = vld [vmem:[%s239 + $0x10] sm:$0xff]
        %v254 = vld [vmem:[%s239 + $0x18] sm:$0xff]
        %v255 = vpack.c.bf16 %v252, %v251
        %v256 = vpack.c.bf16 %v254, %v253
        %v257 = vld [vmem:[%s1] sm:$0xf]
        %v258 = vld [vmem:[%s1 + $0x4] sm:$0xf]
        %v259 = vld [vmem:[%s2] sm:$0x1]
        %v261 = vlaneseq
        %v262 = vshrl.u32 %v261, 7
        %v263 = vsub.s32 0, %v262
        %v264 = vrot.slane %v259, %v263
        %v268 = vunpack.c.l.b16 %v257
        %v269 = vunpack.c.l.b16 %v258
        %v270 = vpack.c.b16 %v269, %v268
        %vm272 = vcmask 130048
        %v274 = vsel %vm272, %v255, 0
        %v277 = vsel %vm272, %v256, 0
        %279 = vmatprep.subr.bf16.mxu0 0
        %280 = vmatpush1.bf16.msra.mxu0 0
        %281 = vmatprep.subr.bf16.mxu0 0
        %282 = vmatpush1.bf16.msra.mxu0 0
        %283 = vmatprep.subr.bf16.mxu0 0
        %284 = vmatpush1.bf16.msra.mxu0 0
        %285 = vmatprep.subr.bf16.mxu0 0
        %286 = vmatpush1.bf16.msra.mxu0 0
        %287 = vmatprep.subr.bf16.mxu0 0
        %288 = vmatpush1.bf16.msra.mxu0 0
        %289 = vmatprep.subr.bf16.mxu0 0
        %290 = vmatpush1.bf16.msra.mxu0 0
        %291 = vmatprep.subr.bf16.mxu0 0
        %292 = vmatpush1.bf16.msra.mxu0 0
        %293 = vmatprep.subr.bf16.mxu0 0
        %294 = vmatpush1.bf16.msra.mxu0 %v270
        %295 = vmatprep.subr.bf16.mxu0 0
        %296 = vmatpush2.bf16.msra.mxu0 0
        %297 = vmatprep.subr.bf16.mxu0 0
        %298 = vmatpush2.bf16.msra.mxu0 0
        %299 = vmatprep.subr.bf16.mxu0 0
        %300 = vmatpush2.bf16.msra.mxu0 0
        %301 = vmatprep.subr.bf16.mxu0 0
        %302 = vmatpush2.bf16.msra.mxu0 0
        %303 = vmatprep.subr.bf16.mxu0 0
        %304 = vmatpush2.bf16.msra.mxu0 0
        %305 = vmatprep.subr.bf16.mxu0 0
        %306 = vmatpush2.bf16.msra.mxu0 0
        %307 = vmatprep.subr.bf16.mxu0 0
        %308 = vmatpush2.bf16.msra.mxu0 0
        %309 = vmatprep.subr.bf16.mxu0 0
        %310 = vmatpush2.bf16.msra.mxu0 0
        %311 = vmatprep.mubr.bf16.mxu0 0
        %312 = vmatmul.mubr.bf16.gmra.mxu0 %v274
        %v313 = vpop.f32.mrf.mxu0
        %v314 = vadd.f32 %v264, %v313
        %v315 = vpop.f32.mrf.mxu0
        %v316 = vpop.f32.mrf.mxu0
        %v317 = vadd.f32 %v264, %v316
        %v318 = vpop.f32.mrf.mxu0
        %319 = vmatprep.mubr.bf16.mxu0 0
        %320 = vmatmul.mubr.bf16.gmra.mxu0 %v277
        %v321 = vpop.f32.mrf.mxu0
        %v322 = vadd.f32 %v264, %v321
        %v323 = vpop.f32.mrf.mxu0
        %v324 = vpop.f32.mrf.mxu0
        %v325 = vadd.f32 %v264, %v324
        %v326 = vpop.f32.mrf.mxu0
        %327 = vdwg.mxu0
        %v328 = vmax.f32 %v314, 0.0
        %v329 = vmax.f32 %v317, 0.0
        %v330 = vmax.f32 %v322, 0.0
        %v331 = vmax.f32 %v325, 0.0
        %v332 = vpack.c.bf16 %v329, %v328
        %v333 = vpack.c.bf16 %v331, %v330
        %v334 = vld [vmem:[%s3] sm:$0xf]
        %v335 = vld [vmem:[%s3 + $0x4] sm:$0xf]
        %v336 = vld [vmem:[%s3 + $0x8] sm:$0xf]
        %v337 = vld [vmem:[%s3 + $0xc] sm:$0xf]
        %v338 = vld [vmem:[%s3 + $0x10] sm:$0xf]
        %v339 = vld [vmem:[%s3 + $0x14] sm:$0xf]
        %v340 = vld [vmem:[%s3 + $0x18] sm:$0xf]
        %v341 = vld [vmem:[%s3 + $0x1c] sm:$0xf]
        %v342 = vld [vmem:[%s3 + $0x20] sm:$0xf]
        %v343 = vld [vmem:[%s3 + $0x24] sm:$0xf]
        %v344 = vld [vmem:[%s3 + $0x28] sm:$0xf]
        %v345 = vld [vmem:[%s3 + $0x2c] sm:$0xf]
        %v346 = vld [vmem:[%s3 + $0x30] sm:$0xf]
        %v347 = vld [vmem:[%s3 + $0x34] sm:$0xf]
        %v348 = vld [vmem:[%s3 + $0x38] sm:$0xf]
        %v349 = vld [vmem:[%s3 + $0x3c] sm:$0xf]
        %v350 = vld [vmem:[%s4] sm:$0x1]
        %v352 = vlaneseq
        %v353 = vshrl.u32 %v352, 7
        %v354 = vsub.s32 0, %v353
        %v355 = vrot.slane %v350, %v354
        %v373 = vunpack.c.l.b16 %v334
        %v374 = vunpack.c.l.b16 %v335
        %v375 = vunpack.c.l.b16 %v336
        %v376 = vunpack.c.l.b16 %v337
        %v377 = vunpack.c.l.b16 %v338
        %v378 = vunpack.c.l.b16 %v339
        %v379 = vunpack.c.l.b16 %v340
        %v380 = vunpack.c.l.b16 %v341
        %v381 = vunpack.c.l.b16 %v342
        %v382 = vunpack.c.l.b16 %v343
        %v383 = vunpack.c.l.b16 %v344
        %v384 = vunpack.c.l.b16 %v345
        %v385 = vunpack.c.l.b16 %v346
        %v386 = vunpack.c.l.b16 %v347
        %v387 = vunpack.c.l.b16 %v348
        %v388 = vunpack.c.l.b16 %v349
        %v389 = vpack.c.b16 %v374, %v373
        %v390 = vpack.c.b16 %v376, %v375
        %v391 = vpack.c.b16 %v378, %v377
        %v392 = vpack.c.b16 %v380, %v379
        %v393 = vpack.c.b16 %v382, %v381
        %v394 = vpack.c.b16 %v384, %v383
        %v395 = vpack.c.b16 %v386, %v385
        %v396 = vpack.c.b16 %v388, %v387
        %405 = vmatprep.subr.bf16.mxu0 0
        %406 = vmatpush1.bf16.msra.mxu0 %v396
        %407 = vmatprep.subr.bf16.mxu0 0
        %408 = vmatpush1.bf16.msra.mxu0 %v395
        %409 = vmatprep.subr.bf16.mxu0 0
        %410 = vmatpush1.bf16.msra.mxu0 %v394
        %411 = vmatprep.subr.bf16.mxu0 0
        %412 = vmatpush1.bf16.msra.mxu0 %v393
        %413 = vmatprep.subr.bf16.mxu0 0
        %414 = vmatpush1.bf16.msra.mxu0 %v392
        %415 = vmatprep.subr.bf16.mxu0 0
        %416 = vmatpush1.bf16.msra.mxu0 %v391
        %417 = vmatprep.subr.bf16.mxu0 0
        %418 = vmatpush1.bf16.msra.mxu0 %v390
        %419 = vmatprep.subr.bf16.mxu0 0
        %420 = vmatpush1.bf16.msra.mxu0 %v389
        %421 = vmatprep.subr.bf16.mxu0 0
        %422 = vmatpush2.bf16.msra.mxu0 0
        %423 = vmatprep.subr.bf16.mxu0 0
        %424 = vmatpush2.bf16.msra.mxu0 0
        %425 = vmatprep.subr.bf16.mxu0 0
        %426 = vmatpush2.bf16.msra.mxu0 0
        %427 = vmatprep.subr.bf16.mxu0 0
        %428 = vmatpush2.bf16.msra.mxu0 0
        %429 = vmatprep.subr.bf16.mxu0 0
        %430 = vmatpush2.bf16.msra.mxu0 0
        %431 = vmatprep.subr.bf16.mxu0 0
        %432 = vmatpush2.bf16.msra.mxu0 0
        %433 = vmatprep.subr.bf16.mxu0 0
        %434 = vmatpush2.bf16.msra.mxu0 0
        %435 = vmatprep.subr.bf16.mxu0 0
        %436 = vmatpush2.bf16.msra.mxu0 0
        %437 = vmatprep.mubr.bf16.mxu0 0
        %438 = vmatmul.mubr.bf16.gmra.mxu0 %v332
        %v439 = vpop.f32.mrf.mxu0
        %v440 = vadd.f32 %v355, %v439
        %v441 = vpop.f32.mrf.mxu0
        %v442 = vpop.f32.mrf.mxu0
        %v443 = vadd.f32 %v355, %v442
        %v444 = vpop.f32.mrf.mxu0
        %445 = vmatprep.mubr.bf16.mxu0 0
        %446 = vmatmul.mubr.bf16.gmra.mxu0 %v333
        %v447 = vpop.f32.mrf.mxu0
        %v448 = vadd.f32 %v355, %v447
        %v449 = vpop.f32.mrf.mxu0
        %v450 = vpop.f32.mrf.mxu0
        %v451 = vadd.f32 %v355, %v450
        %v452 = vpop.f32.mrf.mxu0
        %453 = vdwg.mxu0
        %v454 = vmax.f32 %v440, 0.0
        %v455 = vmax.f32 %v443, 0.0
        %v456 = vmax.f32 %v448, 0.0
        %v457 = vmax.f32 %v451, 0.0
        %v458 = vpack.c.bf16 %v455, %v454
        %v459 = vpack.c.bf16 %v457, %v456
        %v462 = vunpack.c.l.b16 %v458
        %v463 = vunpack.c.h.b16 %v458
        %v464 = vunpack.c.l.b16 %v459
        %v465 = vunpack.c.h.b16 %v459
        %v466 = vpack.c.b16 %v462, %v462
        %v467 = vpack.c.b16 %v463, %v463
        %v468 = vpack.c.b16 %v464, %v464
        %v469 = vpack.c.b16 %v465, %v465
        %474 = vst [vmem:[%s230] sm:$0xf] %v466
        %475 = vst [vmem:[%s230 + $0x4] sm:$0xf] %v467
        %476 = vst [vmem:[%s230 + $0x8] sm:$0xf] %v468
        %477 = vst [vmem:[%s230 + $0xc] sm:$0xf] %v469
        %s478 = sand.u32 %s137, 1
        %s479 = scalar_lea.sflag [#allocation3], %s478
        %s480 = sand.u32 %s137, 1
        %s481 = smul.addr %s480, 16
        %s482 = scalar_lea.vmem [#allocation2], %s481
        // Predicated region
        $region41: #{tpu_custom_call.1} parent=39 // pred_check
          %p483 = pneg %p147
        $region42: #{tpu_custom_call.1} parent=39 // pred_check_branch
          %485 = sbr.rel (%p483) target = $region44
        $region43: #{tpu_custom_call.1} parent=39 // pred_region
          %s486 = smul.u32 4, %s19
          %s487 = ssub.s32 7, %s486
          %p488 = scmp.lt.s32.totalorder %s487, 4
          %s489 = scalar_select %p488, %s487, 4
          %s490 = smul.u32 64, %s489
          %s492 = ssub.s32 256, %s490
          %493 = vsyncadd %s479, %s492
          %p494 = scmp.ne.s32.totalorder 0, %s490
          %s495 = smul.addr %s486, 64
          %s496 = scalar_lea.hbm %s5, %s495
          %s497 = smul.u32 4, %s489
          %s498 = sshll.u32 %s482, 4
          %s499 = int_to_ptr.vmem [resolvable:$true] %s498
          %s500 = sshll.u32 %s497, 4
          %504 = dma.vmem_to_hbm [thread:$0]  (%p494), %s499, %s500, %s496, %s479, 64, 64, 4
        $region44: #{tpu_custom_call.1} parent=39 // pred_fallthru
          _
      $region40: #{tpu_custom_call.1} parent=5 // pred_fallthru
        _
      %p505 = scmp.le.s32.totalorder 2, %s14
      // Predicated region
      $region45: #{tpu_custom_call.1} parent=5 // pred_check
        %p506 = pneg %p505
      $region46: #{tpu_custom_call.1} parent=5 // pred_check_branch
        %508 = sbr.rel (%p506) target = $region48
      $region47: #{tpu_custom_call.1} parent=5 // pred_region
        %s509 = ssub.s32 %s14, 2
        // Predicated region
        $region49: #{tpu_custom_call.1} parent=47 // pred_check
          %p510 = pneg %p153
        $region50: #{tpu_custom_call.1} parent=47 // pred_check_branch
          %512 = sbr.rel (%p510) target = $region52
        $region51: #{tpu_custom_call.1} parent=47 // pred_region
          %s513 = sand.u32 %s138, 1
          %s514 = scalar_lea.sflag [#allocation3], %s513
          %s515 = sand.u32 %s138, 1
          %s516 = smul.addr %s515, 16
          %s517 = scalar_lea.vmem [#allocation2], %s516
          %518 = dma.done %s514, 256
        $region52: #{tpu_custom_call.1} parent=47 // pred_fallthru
          _
      $region48: #{tpu_custom_call.1} parent=5 // pred_fallthru
        _
    $region6: #{tpu_custom_call.1} parent=1 // loop_footer
      %s18 = sadd.s32 1, %s14
    $region7: #{tpu_custom_call.1} parent=1 // loop_footer_branch
      %13 = sbr.rel target = $region3
    $region8: #{tpu_custom_call.1} parent=1 // loop_exit
      _
    %519 = vsyncpa [#allocation3], 1
    %s520 = scalar_lea.sflag [#allocation3], 1
    %521 = vsyncpa %s520, 1

</llo_original>
